<compile_context>
chip_gen: v7x
topology: tpu7x:2x2x1
jax: 0.10.0
libtpu: 0.0.40
codegen_flags: <defaults>
</compile_context>

<pallas_src>
import functools
import math

import jax
import jax.numpy as jnp
from jax.experimental import pallas as pl
from jax.experimental.pallas import tpu as pltpu


def _round_up(x, m):
    return (x + m - 1) // m * m


def _mh_attention_map_kernel(q_ref, k_ref, wq_ref, bq_ref, wk_ref, bk_ref,
                             red_ref, out_ref, *, num_heads):
    # q-side projection onto expanded head-pair weights (norm folded into wq/bq):
    #   qe[p, n*hidden + m*D + c] = norm * (q @ Wq + bq)[p, n*D + c]
    qe = jnp.dot(q_ref[...], wq_ref[...],
                 preferred_element_type=jnp.float32) + bq_ref[...]
    # k-side projection on the natural (C, hidden) weights; tile whole
    # hidden-sized lane blocks to reach the same head-pair layout:
    #   ke[p, n*hidden + m*D + c] = (k @ Wk + bk)[p, m*D + c]
    kp = jnp.dot(k_ref[...], wk_ref[...],
                 preferred_element_type=jnp.float32) + bk_ref[...]
    ke = jnp.tile(kp, (1, num_heads))

    # Full-lane-width VPU multiply (f32), then reduce every D-sized lane block
    # with a block-diagonal 0/1 matrix on the MXU (bf16 operands, f32 accum):
    #   scores[p, n*H + m] = sum_c qe[p, n*hidden + m*D + c] * ke[p, same]
    prod = qe * ke
    scores = jnp.dot(prod.astype(red_ref.dtype), red_ref[...],
                     preferred_element_type=jnp.float32)

    # Joint softmax over the flattened (n, m) axis (H*H lanes).
    mx = jnp.max(scores, axis=-1, keepdims=True)
    e = jnp.exp(scores - mx)
    denom = jnp.sum(e, axis=-1, keepdims=True)
    # approx=True: rows sum to 1 within ~2^-12 relative error (EUP vrcp).
    out_ref[...] = e * pl.reciprocal(denom, approx=True)
    # TODO(synk): nn.Dropout(p=0.0) is an identity; no in-kernel RNG dropout.


def _default_tiling():
    """Generation-aware (row_tile, vmem_limit_bytes)."""
    try:
        vmem_cap = pltpu.get_tpu_info().vmem_capacity_bytes
    except Exception:
        vmem_cap = 64 * 1024 * 1024
    if vmem_cap >= 128 * 1024 * 1024:       # v5e / v6e: 128 MiB physical VMEM
        return 1024, 64 * 1024 * 1024
    return 512, 32 * 1024 * 1024            # v7x: 64 MiB physical VMEM


def mh_attention_map(q, k, wq, bq, wk, bk, num_heads, *, row_tile=None,
                     vmem_limit_bytes=None, compute_dtype=jnp.bfloat16):
    """q, k: (B, S, query_dim).  wq/wk: (query_dim, hidden) (pre-transposed
    from PyTorch's (hidden, query_dim)).  Returns (B, S, H, H) float32."""
    B, S, C = q.shape
    hidden = wq.shape[1]
    assert hidden % num_heads == 0
    H = num_heads
    D = hidden // H
    HH = H * H
    HHD = HH * D
    norm = float(hidden / num_heads) ** (-0.5)

    default_tile, default_vmem = _default_tiling()
    if row_tile is None:
        row_tile = default_tile
    if vmem_limit_bytes is None:
        vmem_limit_bytes = default_vmem

    # ---- q-side expanded weights (head-pair layout), norm folded in --------
    # wq_big[:, n*hidden + m*D + c] = norm * wq[:, n*D + c]  (q head block repeated)
    wq_big = (jnp.broadcast_to(wq.reshape(C, H, 1, D), (C, H, H, D))
              .reshape(C, HHD) * norm)
    bq_big = (jnp.broadcast_to(bq.reshape(H, 1, D), (H, H, D))
              .reshape(1, HHD) * norm).astype(jnp.float32)
    # k-side stays natural; kp is tiled across lanes inside the kernel.
    bk2 = bk.reshape(1, hidden).astype(jnp.float32)
    # Block-diagonal 0/1 matrix: reduces each D-sized lane block to one lane.
    red = jnp.repeat(jnp.eye(HH, dtype=jnp.float32), D, axis=0)      # (HHD, HH)

    # ---- row tiling over the flattened (B*S) axis --------------------------
    BS = B * S
    TM = row_tile if BS >= row_tile else _round_up(BS, 8)
    BS_pad = _round_up(BS, TM)
    num_tiles = BS_pad // TM

    q2 = q.reshape(BS, C)
    k2 = k.reshape(BS, C)
    if BS_pad != BS:
        pad = ((0, BS_pad - BS), (0, 0))
        q2 = jnp.pad(q2, pad)        # zero rows: finite scores, sliced off below
        k2 = jnp.pad(k2, pad)
    q2 = q2.astype(compute_dtype)
    k2 = k2.astype(compute_dtype)
    wq_big = wq_big.astype(compute_dtype)
    wk2 = wk.astype(compute_dtype)
    red = red.astype(compute_dtype)  # exact 0/1 values -> single-pass MXU matmul

    def build_in_specs(single_buffer_residents):
        def resident(shape):
            if single_buffer_residents:
                # Grid-invariant block: one VMEM copy is enough.
                return pl.BlockSpec(shape, lambda i: (0, 0),
                                    pipeline_mode=pl.Buffered(1))
            return pl.BlockSpec(shape, lambda i: (0, 0))
        return [
            pl.BlockSpec((TM, C), lambda i: (i, 0)),    # q rows (pipelined)
            pl.BlockSpec((TM, C), lambda i: (i, 0)),    # k rows (pipelined)
            resident((C, HHD)),                         # Wq_big (resident)
            resident((1, HHD)),                         # bq_big (resident)
            resident((C, hidden)),                      # Wk natural (resident)
            resident((1, hidden)),                      # bk (resident)
            resident((HHD, HH)),                        # reduction matrix
        ]

    def run(single_buffer_residents):
        return pl.pallas_call(
            functools.partial(_mh_attention_map_kernel, num_heads=H),
            out_shape=jax.ShapeDtypeStruct((BS_pad, HH), jnp.float32),
            grid=(num_tiles,),
            in_specs=build_in_specs(single_buffer_residents),
            out_specs=pl.BlockSpec((TM, HH), lambda i: (i, 0)),
            compiler_params=pltpu.CompilerParams(
                dimension_semantics=("parallel",),   # independent row tiles
                vmem_limit_bytes=vmem_limit_bytes),
        )(q2, k2, wq_big, bq_big, wk2, bk2, red)

    try:
        out = run(single_buffer_residents=True)
    except Exception:
        # TODO(synk): pl.Buffered(1) is purely a VMEM-headroom optimization;
        # fall back to default double buffering if this jax build rejects it.
        out = run(single_buffer_residents=False)

    return out[:BS].reshape(B, S, H, H)


def _reference(q, k, wq, bq, wk, bk, num_heads):
    """Pure-JAX f32 mirror of the PyTorch forward, for verification."""
    B, S, _ = q.shape
    hidden = wq.shape[1]
    D = hidden // num_heads
    norm = float(hidden / num_heads) ** (-0.5)
    qp = q @ wq + bq
    kp = k @ wk + bk
    qh = qp.reshape(B, S, num_heads, D)
    kh = kp.reshape(B, S, num_heads, D)
    w = jnp.einsum('bqnc,bqmc->bqnm', qh * norm, kh)   # == 'bqnc,bqcm' w/ kh.T
    wflat = jax.nn.softmax(w.reshape(B, S, num_heads * num_heads), axis=-1)
    return wflat.reshape(B, S, num_heads, num_heads)


if __name__ == "__main__":
    # Small shapes consistent with the module.
    B, S = 2, 8
    query_dim, hidden_dim, num_heads = 32, 32, 4

    key = jax.random.PRNGKey(0)
    kq, kk, kwq, kwk = jax.random.split(key, 4)

    q = jax.random.normal(kq, (B, S, query_dim), dtype=jnp.float32)
    k = jax.random.normal(kk, (B, S, query_dim), dtype=jnp.float32)

    # Deterministic parameter init mirroring __init__:
    #   xavier_uniform_ on weights, zeros_ on biases.
    bound = math.sqrt(6.0 / (query_dim + hidden_dim))
    # PyTorch weight is (hidden, query_dim); store transposed (C, hidden) so
    # the kernel computes x @ W directly.
    wq = jax.random.uniform(kwq, (query_dim, hidden_dim),
                            minval=-bound, maxval=bound, dtype=jnp.float32)
    wk = jax.random.uniform(kwk, (query_dim, hidden_dim),
                            minval=-bound, maxval=bound, dtype=jnp.float32)
    bq = jnp.zeros((hidden_dim,), dtype=jnp.float32)
    bk = jnp.zeros((hidden_dim,), dtype=jnp.float32)
    # Note: v_linear exists in __init__ but is unused in forward(); omitted.

    out = mh_attention_map(q, k, wq, bq, wk, bk, num_heads)
    out = jax.block_until_ready(out)

    ref = _reference(q, k, wq, bq, wk, bk, num_heads)
    assert out.shape == (B, S, num_heads, num_heads), out.shape
    # bf16 matmul operands + approx reciprocal -> slightly looser tolerance
    # than the pure-f32 path.
    assert jnp.allclose(out, ref, atol=2e-2, rtol=2e-2), \
        float(jnp.max(jnp.abs(out - ref)))

    print("KERNEL_OK")
</pallas_src>

<mosaic_0001>
module attributes {stable_mosaic.version = 11 : i64} {
  func.func @_mh_attention_map_kernel(%arg0: i32, %arg1: memref<16x32xbf16, #tpu.memory_space<vmem>>, %arg2: memref<16x32xbf16, #tpu.memory_space<vmem>>, %arg3: memref<32x128xbf16, #tpu.memory_space<vmem>>, %arg4: memref<1x128xf32, #tpu.memory_space<vmem>>, %arg5: memref<32x32xbf16, #tpu.memory_space<vmem>>, %arg6: memref<1x32xf32, #tpu.memory_space<vmem>>, %arg7: memref<128x16xbf16, #tpu.memory_space<vmem>>, %arg8: memref<16x16xf32, #tpu.memory_space<vmem>>) attributes {dimension_semantics = [#tpu.dimension_semantics<parallel>], iteration_bounds = array<i64: 1>, scalar_prefetch = 0 : i64, scratch_operands = 0 : i64, tpu.core_type = #tpu.core_type<tc>, window_params = [{transform_indices = @transform_0, window_bounds = array<i64: 16, 32>}, {transform_indices = @transform_1, window_bounds = array<i64: 16, 32>}, {pipeline_mode = #tpu.pipeline_mode<synchronous>, transform_indices = @transform_2, window_bounds = array<i64: 32, 128>}, {pipeline_mode = #tpu.pipeline_mode<synchronous>, transform_indices = @transform_3, window_bounds = array<i64: 1, 128>}, {pipeline_mode = #tpu.pipeline_mode<synchronous>, transform_indices = @transform_4, window_bounds = array<i64: 32, 32>}, {pipeline_mode = #tpu.pipeline_mode<synchronous>, transform_indices = @transform_5, window_bounds = array<i64: 1, 32>}, {pipeline_mode = #tpu.pipeline_mode<synchronous>, transform_indices = @transform_6, window_bounds = array<i64: 128, 16>}, {transform_indices = @transform_7, window_bounds = array<i64: 16, 16>}]} {
    %c0 = arith.constant 0 : index
    %c0_0 = arith.constant 0 : index
    %0 = vector.load %arg1[%c0, %c0_0] : memref<16x32xbf16, #tpu.memory_space<vmem>>, vector<16x32xbf16>
    %c0_1 = arith.constant 0 : index
    %c0_2 = arith.constant 0 : index
    %1 = vector.load %arg3[%c0_1, %c0_2] : memref<32x128xbf16, #tpu.memory_space<vmem>>, vector<32x128xbf16>
    %cst = arith.constant dense<0.000000e+00> : vector<16x128xf32>
    %2 = tpu.matmul %0, %1, %cst {dimension_numbers = #tpu.dot_dimension_numbers<[1], [0], [0], [1], [0, 0, 1, 1], [], []>} : vector<16x32xbf16>, vector<32x128xbf16>, vector<16x128xf32> -> vector<16x128xf32>
    %c0_3 = arith.constant 0 : index
    %c0_4 = arith.constant 0 : index
    %3 = vector.load %arg4[%c0_3, %c0_4] : memref<1x128xf32, #tpu.memory_space<vmem>>, vector<1x128xf32>
    %4 = vector.broadcast %3 : vector<1x128xf32> to vector<16x128xf32>
    %5 = arith.addf %2, %4 : vector<16x128xf32>
    %c0_5 = arith.constant 0 : index
    %c0_6 = arith.constant 0 : index
    %6 = vector.load %arg2[%c0_5, %c0_6] : memref<16x32xbf16, #tpu.memory_space<vmem>>, vector<16x32xbf16>
    %c0_7 = arith.constant 0 : index
    %c0_8 = arith.constant 0 : index
    %7 = vector.load %arg5[%c0_7, %c0_8] : memref<32x32xbf16, #tpu.memory_space<vmem>>, vector<32x32xbf16>
    %cst_9 = arith.constant dense<0.000000e+00> : vector<16x32xf32>
    %8 = tpu.matmul %6, %7, %cst_9 {dimension_numbers = #tpu.dot_dimension_numbers<[1], [0], [0], [1], [0, 0, 1, 1], [], []>} : vector<16x32xbf16>, vector<32x32xbf16>, vector<16x32xf32> -> vector<16x32xf32>
    %c0_10 = arith.constant 0 : index
    %c0_11 = arith.constant 0 : index
    %9 = vector.load %arg6[%c0_10, %c0_11] : memref<1x32xf32, #tpu.memory_space<vmem>>, vector<1x32xf32>
    %10 = vector.broadcast %9 : vector<1x32xf32> to vector<16x32xf32>
    %11 = arith.addf %8, %10 : vector<16x32xf32>
    %12 = tpu.concatenate %11, %11, %11, %11 in 1 : vector<16x32xf32>, vector<16x32xf32>, vector<16x32xf32>, vector<16x32xf32> -> vector<16x128xf32>
    %13 = arith.mulf %5, %12 : vector<16x128xf32>
    %14 = arith.truncf %13 : vector<16x128xf32> to vector<16x128xbf16>
    %c0_12 = arith.constant 0 : index
    %c0_13 = arith.constant 0 : index
    %15 = vector.load %arg7[%c0_12, %c0_13] : memref<128x16xbf16, #tpu.memory_space<vmem>>, vector<128x16xbf16>
    %cst_14 = arith.constant dense<0.000000e+00> : vector<16x16xf32>
    %16 = tpu.matmul %14, %15, %cst_14 {dimension_numbers = #tpu.dot_dimension_numbers<[1], [0], [0], [1], [0, 0, 1, 1], [], []>} : vector<16x128xbf16>, vector<128x16xbf16>, vector<16x16xf32> -> vector<16x16xf32>
    %cst_15 = arith.constant dense<0xFF800000> : vector<16xf32>
    %17 = vector.multi_reduction <maximumf>, %16, %cst_15 [1] : vector<16x16xf32> to vector<16xf32>
    %18 = vector.shape_cast %17 : vector<16xf32> to vector<16x1xf32>
    %19 = vector.broadcast %18 : vector<16x1xf32> to vector<16x16xf32>
    %20 = arith.subf %16, %19 : vector<16x16xf32>
    %21 = math.exp %20 : vector<16x16xf32>
    %cst_16 = arith.constant dense<0.000000e+00> : vector<16xf32>
    %22 = vector.multi_reduction <add>, %21, %cst_16 [1] : vector<16x16xf32> to vector<16xf32>
    %23 = vector.shape_cast %22 : vector<16xf32> to vector<16x1xf32>
    %24 = tpu.reciprocal %23 {approx = true} : vector<16x1xf32> -> vector<16x1xf32>
    %25 = vector.broadcast %24 : vector<16x1xf32> to vector<16x16xf32>
    %26 = arith.mulf %21, %25 : vector<16x16xf32>
    %c0_17 = arith.constant 0 : index
    %c0_18 = arith.constant 0 : index
    %27 = vector.load %arg8[%c0_17, %c0_18] : memref<16x16xf32, #tpu.memory_space<vmem>>, vector<16x16xf32>
    tpu.vector_store %arg8[%c0_17, %c0_18], %26 {strides = array<i32>} : memref<16x16xf32, #tpu.memory_space<vmem>>, vector<16x16xf32>,
    return
  }
  func.func @transform_0(%arg0: i32) -> (i32, i32) {
    %c0_i32 = arith.constant 0 : i32
    %c0_i32_0 = arith.constant 0 : i32
    return %arg0, %c0_i32 : i32, i32
  }
  func.func @transform_1(%arg0: i32) -> (i32, i32) {
    %c0_i32 = arith.constant 0 : i32
    %c0_i32_0 = arith.constant 0 : i32
    return %arg0, %c0_i32 : i32, i32
  }
  func.func @transform_2(%arg0: i32) -> (i32, i32) {
    %c0_i32 = arith.constant 0 : i32
    %c0_i32_0 = arith.constant 0 : i32
    %c0_i32_1 = arith.constant 0 : i32
    return %c0_i32, %c0_i32_0 : i32, i32
  }
  func.func @transform_3(%arg0: i32) -> (i32, i32) {
    %c0_i32 = arith.constant 0 : i32
    %c0_i32_0 = arith.constant 0 : i32
    %c0_i32_1 = arith.constant 0 : i32
    return %c0_i32, %c0_i32_0 : i32, i32
  }
  func.func @transform_4(%arg0: i32) -> (i32, i32) {
    %c0_i32 = arith.constant 0 : i32
    %c0_i32_0 = arith.constant 0 : i32
    %c0_i32_1 = arith.constant 0 : i32
    return %c0_i32, %c0_i32_0 : i32, i32
  }
  func.func @transform_5(%arg0: i32) -> (i32, i32) {
    %c0_i32 = arith.constant 0 : i32
    %c0_i32_0 = arith.constant 0 : i32
    %c0_i32_1 = arith.constant 0 : i32
    return %c0_i32, %c0_i32_0 : i32, i32
  }
  func.func @transform_6(%arg0: i32) -> (i32, i32) {
    %c0_i32 = arith.constant 0 : i32
    %c0_i32_0 = arith.constant 0 : i32
    %c0_i32_1 = arith.constant 0 : i32
    return %c0_i32, %c0_i32_0 : i32, i32
  }
  func.func @transform_7(%arg0: i32) -> (i32, i32) {
    %c0_i32 = arith.constant 0 : i32
    %c0_i32_0 = arith.constant 0 : i32
    return %arg0, %c0_i32 : i32, i32
  }
}

module attributes {stable_mosaic.version = 11 : i64} {
  func.func @_mh_attention_map_kernel(%arg0: i32, %arg1: memref<16x32xbf16, #tpu.memory_space<vmem>>, %arg2: memref<16x32xbf16, #tpu.memory_space<vmem>>, %arg3: memref<32x128xbf16, #tpu.memory_space<vmem>>, %arg4: memref<1x128xf32, #tpu.memory_space<vmem>>, %arg5: memref<32x32xbf16, #tpu.memory_space<vmem>>, %arg6: memref<1x32xf32, #tpu.memory_space<vmem>>, %arg7: memref<128x16xbf16, #tpu.memory_space<vmem>>, %arg8: memref<16x16xf32, #tpu.memory_space<vmem>>) attributes {dimension_semantics = [#tpu.dimension_semantics<parallel>], iteration_bounds = array<i64: 1>, scalar_prefetch = 0 : i64, scratch_operands = 0 : i64, tpu.core_type = #tpu.core_type<tc>, window_params = [{transform_indices = @transform_0, window_bounds = array<i64: 16, 32>}, {transform_indices = @transform_1, window_bounds = array<i64: 16, 32>}, {pipeline_mode = #tpu.pipeline_mode<synchronous>, transform_indices = @transform_2, window_bounds = array<i64: 32, 128>}, {pipeline_mode = #tpu.pipeline_mode<synchronous>, transform_indices = @transform_3, window_bounds = array<i64: 1, 128>}, {pipeline_mode = #tpu.pipeline_mode<synchronous>, transform_indices = @transform_4, window_bounds = array<i64: 32, 32>}, {pipeline_mode = #tpu.pipeline_mode<synchronous>, transform_indices = @transform_5, window_bounds = array<i64: 1, 32>}, {pipeline_mode = #tpu.pipeline_mode<synchronous>, transform_indices = @transform_6, window_bounds = array<i64: 128, 16>}, {transform_indices = @transform_7, window_bounds = array<i64: 16, 16>}]} {
    %c0 = arith.constant 0 : index
    %c0_0 = arith.constant 0 : index
    %0 = vector.load %arg1[%c0, %c0_0] : memref<16x32xbf16, #tpu.memory_space<vmem>>, vector<16x32xbf16>
    %c0_1 = arith.constant 0 : index
    %c0_2 = arith.constant 0 : index
    %1 = vector.load %arg3[%c0_1, %c0_2] : memref<32x128xbf16, #tpu.memory_space<vmem>>, vector<32x128xbf16>
    %cst = arith.constant dense<0.000000e+00> : vector<16x128xf32>
    %2 = tpu.matmul %0, %1, %cst {dimension_numbers = #tpu.dot_dimension_numbers<[1], [0], [0], [1], [0, 0, 1, 1], [], []>} : vector<16x32xbf16>, vector<32x128xbf16>, vector<16x128xf32> -> vector<16x128xf32>
    %c0_3 = arith.constant 0 : index
    %c0_4 = arith.constant 0 : index
    %3 = vector.load %arg4[%c0_3, %c0_4] : memref<1x128xf32, #tpu.memory_space<vmem>>, vector<1x128xf32>
    %4 = vector.broadcast %3 : vector<1x128xf32> to vector<16x128xf32>
    %5 = arith.addf %2, %4 : vector<16x128xf32>
    %c0_5 = arith.constant 0 : index
    %c0_6 = arith.constant 0 : index
    %6 = vector.load %arg2[%c0_5, %c0_6] : memref<16x32xbf16, #tpu.memory_space<vmem>>, vector<16x32xbf16>
    %c0_7 = arith.constant 0 : index
    %c0_8 = arith.constant 0 : index
    %7 = vector.load %arg5[%c0_7, %c0_8] : memref<32x32xbf16, #tpu.memory_space<vmem>>, vector<32x32xbf16>
    %cst_9 = arith.constant dense<0.000000e+00> : vector<16x32xf32>
    %8 = tpu.matmul %6, %7, %cst_9 {dimension_numbers = #tpu.dot_dimension_numbers<[1], [0], [0], [1], [0, 0, 1, 1], [], []>} : vector<16x32xbf16>, vector<32x32xbf16>, vector<16x32xf32> -> vector<16x32xf32>
    %c0_10 = arith.constant 0 : index
    %c0_11 = arith.constant 0 : index
    %9 = vector.load %arg6[%c0_10, %c0_11] : memref<1x32xf32, #tpu.memory_space<vmem>>, vector<1x32xf32>
    %10 = vector.broadcast %9 : vector<1x32xf32> to vector<16x32xf32>
    %11 = arith.addf %8, %10 : vector<16x32xf32>
    %12 = tpu.concatenate %11, %11, %11, %11 in 1 : vector<16x32xf32>, vector<16x32xf32>, vector<16x32xf32>, vector<16x32xf32> -> vector<16x128xf32>
    %13 = arith.mulf %5, %12 : vector<16x128xf32>
    %14 = arith.truncf %13 : vector<16x128xf32> to vector<16x128xbf16>
    %c0_12 = arith.constant 0 : index
    %c0_13 = arith.constant 0 : index
    %15 = vector.load %arg7[%c0_12, %c0_13] : memref<128x16xbf16, #tpu.memory_space<vmem>>, vector<128x16xbf16>
    %cst_14 = arith.constant dense<0.000000e+00> : vector<16x16xf32>
    %16 = tpu.matmul %14, %15, %cst_14 {dimension_numbers = #tpu.dot_dimension_numbers<[1], [0], [0], [1], [0, 0, 1, 1], [], []>} : vector<16x128xbf16>, vector<128x16xbf16>, vector<16x16xf32> -> vector<16x16xf32>
    %cst_15 = arith.constant dense<0xFF800000> : vector<16xf32>
    %17 = vector.multi_reduction <maximumf>, %16, %cst_15 [1] : vector<16x16xf32> to vector<16xf32>
    %18 = vector.shape_cast %17 : vector<16xf32> to vector<16x1xf32>
    %19 = vector.broadcast %18 : vector<16x1xf32> to vector<16x16xf32>
    %20 = arith.subf %16, %19 : vector<16x16xf32>
    %21 = math.exp %20 : vector<16x16xf32>
    %cst_16 = arith.constant dense<0.000000e+00> : vector<16xf32>
    %22 = vector.multi_reduction <add>, %21, %cst_16 [1] : vector<16x16xf32> to vector<16xf32>
    %23 = vector.shape_cast %22 : vector<16xf32> to vector<16x1xf32>
    %24 = tpu.reciprocal %23 {approx = true} : vector<16x1xf32> -> vector<16x1xf32>
    %25 = vector.broadcast %24 : vector<16x1xf32> to vector<16x16xf32>
    %26 = arith.mulf %21, %25 : vector<16x16xf32>
    %c0_17 = arith.constant 0 : index
    %c0_18 = arith.constant 0 : index
    %27 = vector.load %arg8[%c0_17, %c0_18] : memref<16x16xf32, #tpu.memory_space<vmem>>, vector<16x16xf32>
    tpu.vector_store %arg8[%c0_17, %c0_18], %26 {strides = array<i32>} : memref<16x16xf32, #tpu.memory_space<vmem>>, vector<16x16xf32>,
    return
  }
  func.func @transform_0(%arg0: i32) -> (i32, i32) {
    %c0_i32 = arith.constant 0 : i32
    %c0_i32_0 = arith.constant 0 : i32
    return %arg0, %c0_i32 : i32, i32
  }
  func.func @transform_1(%arg0: i32) -> (i32, i32) {
    %c0_i32 = arith.constant 0 : i32
    %c0_i32_0 = arith.constant 0 : i32
    return %arg0, %c0_i32 : i32, i32
  }
  func.func @transform_2(%arg0: i32) -> (i32, i32) {
    %c0_i32 = arith.constant 0 : i32
    %c0_i32_0 = arith.constant 0 : i32
    %c0_i32_1 = arith.constant 0 : i32
    return %c0_i32, %c0_i32_0 : i32, i32
  }
  func.func @transform_3(%arg0: i32) -> (i32, i32) {
    %c0_i32 = arith.constant 0 : i32
    %c0_i32_0 = arith.constant 0 : i32
    %c0_i32_1 = arith.constant 0 : i32
    return %c0_i32, %c0_i32_0 : i32, i32
  }
  func.func @transform_4(%arg0: i32) -> (i32, i32) {
    %c0_i32 = arith.constant 0 : i32
    %c0_i32_0 = arith.constant 0 : i32
    %c0_i32_1 = arith.constant 0 : i32
    return %c0_i32, %c0_i32_0 : i32, i32
  }
  func.func @transform_5(%arg0: i32) -> (i32, i32) {
    %c0_i32 = arith.constant 0 : i32
    %c0_i32_0 = arith.constant 0 : i32
    %c0_i32_1 = arith.constant 0 : i32
    return %c0_i32, %c0_i32_0 : i32, i32
  }
  func.func @transform_6(%arg0: i32) -> (i32, i32) {
    %c0_i32 = arith.constant 0 : i32
    %c0_i32_0 = arith.constant 0 : i32
    %c0_i32_1 = arith.constant 0 : i32
    return %c0_i32, %c0_i32_0 : i32, i32
  }
  func.func @transform_7(%arg0: i32) -> (i32, i32) {
    %c0_i32 = arith.constant 0 : i32
    %c0_i32_0 = arith.constant 0 : i32
    return %arg0, %c0_i32 : i32, i32
  }
}

</mosaic_0001>

<llo_original>
// kernel: tpu_custom_call.1
$region0: #{tpu_custom_call.1}
  #allocation0 [shape = 'u32[]', space=smem, size = 0x4, offset = 0x4, fixed_abs, tag = 'smem constant byte address 0x4 - core index']
  #allocation1 [shape = 'u32[144,128]{1,0:T(1,128)}', space=vmem, size = 0x12000, scoped, tag = 'internal scratch']
  %s0 = inlined_call_operand.vmem [shape: bf16[16,32], index: 0, kind: input, shape index: {}]
  %s1 = inlined_call_operand.vmem [shape: bf16[16,32], index: 1, kind: input, shape index: {}]
  %s2 = inlined_call_operand.vmem [shape: bf16[32,128], index: 2, kind: input, shape index: {}]
  %s3 = inlined_call_operand.vmem [shape: f32[1,128], index: 3, kind: input, shape index: {}]
  %s4 = inlined_call_operand.vmem [shape: bf16[32,32], index: 4, kind: input, shape index: {}]
  %s5 = inlined_call_operand.vmem [shape: f32[1,32], index: 5, kind: input, shape index: {}]
  %s6 = inlined_call_operand.vmem [shape: bf16[128,16], index: 6, kind: input, shape index: {}]
  %s7 = inlined_call_operand.hbm [shape: f32[16,16], index: 7, kind: output, shape index: {}]
  %s8 = sld [smem:[#allocation0]]
  $region38: #{tpu_custom_call.1} parent=0
    _
  %s10 = ssub.s32 1, %s8
  %s11 = scalar_select 0, %s10, %s8
  $region1: #{tpu_custom_call.1} parent=0
    #allocation2 [shape = 'u8[8192]{0}', space=vmem, size = 0x2000, scoped, tag = 'output window, operand 0, single buffered']
    #allocation3 [shape = 's32[1]{0}', space=sflag, size = 0x4, scoped, tag = 'scoped memory for tpu_custom_call.1']
    %12 = vsyncpa [#allocation3], 0
    // Predicated region
    $region2: #{tpu_custom_call.1} parent=1 // pred_check
      _
    $region3: #{tpu_custom_call.1} parent=1 // pred_check_branch
      %14 = sbr.rel (0) target = $region5
    $region4: #{tpu_custom_call.1} parent=1 // pred_region
      _
    $region5: #{tpu_custom_call.1} parent=1 // pred_fallthru
      _
    // Predicated region
    $region6: #{tpu_custom_call.1} parent=1 // pred_check
      _
    $region7: #{tpu_custom_call.1} parent=1 // pred_check_branch
      %16 = sbr.rel (0) target = $region9
    $region8: #{tpu_custom_call.1} parent=1 // pred_region
      _
    $region9: #{tpu_custom_call.1} parent=1 // pred_fallthru
      _
    // Predicated region
    $region10: #{tpu_custom_call.1} parent=1 // pred_check
      _
    $region11: #{tpu_custom_call.1} parent=1 // pred_check_branch
      %18 = sbr.rel (0) target = $region13
    $region12: #{tpu_custom_call.1} parent=1 // pred_region
      _
    $region13: #{tpu_custom_call.1} parent=1 // pred_fallthru
      _
    // Predicated region
    $region14: #{tpu_custom_call.1} parent=1 // pred_check
      _
    $region15: #{tpu_custom_call.1} parent=1 // pred_check_branch
      %20 = sbr.rel (0) target = $region17
    $region16: #{tpu_custom_call.1} parent=1 // pred_region
      _
    $region17: #{tpu_custom_call.1} parent=1 // pred_fallthru
      _
    // Predicated region
    $region18: #{tpu_custom_call.1} parent=1 // pred_check
      _
    $region19: #{tpu_custom_call.1} parent=1 // pred_check_branch
      %22 = sbr.rel (0) target = $region21
    $region20: #{tpu_custom_call.1} parent=1 // pred_region
      _
    $region21: #{tpu_custom_call.1} parent=1 // pred_fallthru
      _
    // Predicated region
    $region22: #{tpu_custom_call.1} parent=1 // pred_check
      _
    $region23: #{tpu_custom_call.1} parent=1 // pred_check_branch
      %24 = sbr.rel (0) target = $region25
    $region24: #{tpu_custom_call.1} parent=1 // pred_region
      _
    $region25: #{tpu_custom_call.1} parent=1 // pred_fallthru
      _
    // Predicated region
    $region26: #{tpu_custom_call.1} parent=1 // pred_check
      _
    $region27: #{tpu_custom_call.1} parent=1 // pred_check_branch
      %26 = sbr.rel (0) target = $region29
    $region28: #{tpu_custom_call.1} parent=1 // pred_region
      _
    $region29: #{tpu_custom_call.1} parent=1 // pred_fallthru
      _
    %v28 = vld [vmem:[%s0] sm:$0xf]
    %v29 = vld [vmem:[%s0 + $0x4] sm:$0xf]
    %v30 = vld [vmem:[%s2] sm:$0xf]
    %v31 = vld [vmem:[%s2 + $0x4] sm:$0xf]
    %v32 = vld [vmem:[%s2 + $0x8] sm:$0xf]
    %v33 = vld [vmem:[%s2 + $0xc] sm:$0xf]
    %v34 = vld [vmem:[%s3] sm:$0x1]
    %v36 = vlaneseq
    %v37 = vshrl.u32 %v36, 7
    %v38 = vsub.s32 0, %v37
    %v39 = vrot.slane %v34, %v38
    %v43 = vunpack.c.l.b16 %v28
    %v44 = vunpack.c.l.b16 %v29
    %v45 = vpack.c.b16 %v44, %v43
    %v50 = vunpack.c.l.b16 %v30
    %v51 = vunpack.c.l.b16 %v31
    %v52 = vunpack.c.l.b16 %v32
    %v53 = vunpack.c.l.b16 %v33
    %v54 = vpack.c.b16 %v51, %v50
    %v55 = vpack.c.b16 %v53, %v52
    %vm58 = vcmask 261120
    %v60 = vsel %vm58, %v45, 0
    %62 = vmatprep.subr.bf16.mxu0 0
    %63 = vmatpush1.bf16.msra.mxu0 %v54
    %64 = vmatprep.subr.bf16.mxu0 0
    %65 = vmatpush1.bf16.msra.mxu0 %v55
    %66 = vmatprep.subr.bf16.mxu0 0
    %67 = vmatpush1.bf16.msra.mxu0 0
    %68 = vmatprep.subr.bf16.mxu0 0
    %69 = vmatpush1.bf16.msra.mxu0 0
    %70 = vmatprep.subr.bf16.mxu0 0
    %71 = vmatpush1.bf16.msra.mxu0 0
    %72 = vmatprep.subr.bf16.mxu0 0
    %73 = vmatpush1.bf16.msra.mxu0 0
    %74 = vmatprep.subr.bf16.mxu0 0
    %75 = vmatpush1.bf16.msra.mxu0 0
    %76 = vmatprep.subr.bf16.mxu0 0
    %77 = vmatpush1.bf16.msra.mxu0 0
    %78 = vmatprep.subr.bf16.mxu0 0
    %79 = vmatpush1.bf16.msra.mxu0 0
    %80 = vmatprep.subr.bf16.mxu0 0
    %81 = vmatpush1.bf16.msra.mxu0 0
    %82 = vmatprep.subr.bf16.mxu0 0
    %83 = vmatpush1.bf16.msra.mxu0 0
    %84 = vmatprep.subr.bf16.mxu0 0
    %85 = vmatpush1.bf16.msra.mxu0 0
    %86 = vmatprep.subr.bf16.mxu0 0
    %87 = vmatpush1.bf16.msra.mxu0 0
    %88 = vmatprep.subr.bf16.mxu0 0
    %89 = vmatpush1.bf16.msra.mxu0 0
    %90 = vmatprep.subr.bf16.mxu0 0
    %91 = vmatpush1.bf16.msra.mxu0 0
    %92 = vmatprep.subr.bf16.mxu0 0
    %93 = vmatpush1.bf16.msra.mxu0 0
    %94 = vmatprep.mubr.bf16.mxu0 0
    %95 = vmatmul.mubr.bf16.gmra.mrb[0].mxu0 %v60
    %v96 = vpop.f32.mrb[0].mxu0
    %v97 = vadd.f32 %v39, %v96
    %v98 = vpop.f32.mrb[0].mxu0
    %v99 = vpop.f32.mrb[0].mxu0
    %v100 = vadd.f32 %v39, %v99
    %v101 = vpop.f32.mrb[0].mxu0
    %102 = vdwg.mxu0
    %v103 = vld [vmem:[%s1] sm:$0xf]
    %v104 = vld [vmem:[%s1 + $0x4] sm:$0xf]
    %v105 = vld [vmem:[%s4] sm:$0xf]
    %v106 = vld [vmem:[%s4 + $0x4] sm:$0xf]
    %v107 = vld [vmem:[%s4 + $0x8] sm:$0xf]
    %v108 = vld [vmem:[%s4 + $0xc] sm:$0xf]
    %v109 = vld [vmem:[%s5] sm:$0x1]
    %v111 = vlaneseq
    %v112 = vshrl.u32 %v111, 7
    %v113 = vsub.s32 0, %v112
    %v114 = vrot.slane %v109, %v113
    %v118 = vunpack.c.l.b16 %v103
    %v119 = vunpack.c.l.b16 %v104
    %v120 = vpack.c.b16 %v119, %v118
    %v125 = vunpack.c.l.b16 %v105
    %v126 = vunpack.c.l.b16 %v106
    %v127 = vunpack.c.l.b16 %v107
    %v128 = vunpack.c.l.b16 %v108
    %v129 = vpack.c.b16 %v126, %v125
    %v130 = vpack.c.b16 %v128, %v127
    %v134 = vsel %vm58, %v120, 0
    %136 = vmatprep.subr.bf16.mxu0 0
    %137 = vmatpush1.bf16.msra.mxu0 %v129
    %138 = vmatprep.subr.bf16.mxu0 0
    %139 = vmatpush1.bf16.msra.mxu0 %v130
    %140 = vmatprep.subr.bf16.mxu0 0
    %141 = vmatpush1.bf16.msra.mxu0 0
    %142 = vmatprep.subr.bf16.mxu0 0
    %143 = vmatpush1.bf16.msra.mxu0 0
    %144 = vmatprep.subr.bf16.mxu0 0
    %145 = vmatpush1.bf16.msra.mxu0 0
    %146 = vmatprep.subr.bf16.mxu0 0
    %147 = vmatpush1.bf16.msra.mxu0 0
    %148 = vmatprep.subr.bf16.mxu0 0
    %149 = vmatpush1.bf16.msra.mxu0 0
    %150 = vmatprep.subr.bf16.mxu0 0
    %151 = vmatpush1.bf16.msra.mxu0 0
    %152 = vmatprep.subr.bf16.mxu0 0
    %153 = vmatpush1.bf16.msra.mxu0 0
    %154 = vmatprep.subr.bf16.mxu0 0
    %155 = vmatpush1.bf16.msra.mxu0 0
    %156 = vmatprep.subr.bf16.mxu0 0
    %157 = vmatpush1.bf16.msra.mxu0 0
    %158 = vmatprep.subr.bf16.mxu0 0
    %159 = vmatpush1.bf16.msra.mxu0 0
    %160 = vmatprep.subr.bf16.mxu0 0
    %161 = vmatpush1.bf16.msra.mxu0 0
    %162 = vmatprep.subr.bf16.mxu0 0
    %163 = vmatpush1.bf16.msra.mxu0 0
    %164 = vmatprep.subr.bf16.mxu0 0
    %165 = vmatpush1.bf16.msra.mxu0 0
    %166 = vmatprep.subr.bf16.mxu0 0
    %167 = vmatpush1.bf16.msra.mxu0 0
    %168 = vmatprep.mubr.bf16.mxu0 0
    %169 = vmatmul.mubr.bf16.gmra.mrb[0].mxu0 %v134
    %v170 = vpop.f32.mrb[0].mxu0
    %v171 = vadd.f32 %v114, %v170
    %v172 = vpop.f32.mrb[0].mxu0
    %v173 = vpop.f32.mrb[0].mxu0
    %v174 = vadd.f32 %v114, %v173
    %v175 = vpop.f32.mrb[0].mxu0
    %176 = vdwg.mxu0
    %179 = vrot.lane.b32.xlu0 %v171, 32
    %v180 = vpop.permute.xlu0 %179
    %181 = vrot.lane.b32.xlu0 %v174, 32
    %v182 = vpop.permute.xlu0 %181
    %185 = vrot.lane.b32.xlu0 %v171, 64
    %v186 = vpop.permute.xlu0 %185
    %187 = vrot.lane.b32.xlu0 %v174, 64
    %v188 = vpop.permute.xlu0 %187
    %191 = vrot.lane.b32.xlu0 %v171, 96
    %v192 = vpop.permute.xlu0 %191
    %193 = vrot.lane.b32.xlu0 %v174, 96
    %v194 = vpop.permute.xlu0 %193
    %v197 = vsel %vm58, %v171, %v180
    %v198 = vsel %vm58, %v174, %v182
    %vm199 = vcmask 523264
    %v200 = vsel %vm199, %v197, %v186
    %v201 = vsel %vm199, %v198, %v188
    %vm202 = vcmask 785408
    %v203 = vsel %vm202, %v200, %v192
    %v204 = vsel %vm202, %v201, %v194
    %v205 = vmul.f32 %v97, %v203
    %v206 = vmul.f32 %v100, %v204
    %v207 = vpack.c.bf16 %v206, %v205
    %v208 = vld [vmem:[%s6] sm:$0xf]
    %v209 = vld [vmem:[%s6 + $0x4] sm:$0xf]
    %v210 = vld [vmem:[%s6 + $0x8] sm:$0xf]
    %v211 = vld [vmem:[%s6 + $0xc] sm:$0xf]
    %v212 = vld [vmem:[%s6 + $0x10] sm:$0xf]
    %v213 = vld [vmem:[%s6 + $0x14] sm:$0xf]
    %v214 = vld [vmem:[%s6 + $0x18] sm:$0xf]
    %v215 = vld [vmem:[%s6 + $0x1c] sm:$0xf]
    %v216 = vld [vmem:[%s6 + $0x20] sm:$0xf]
    %v217 = vld [vmem:[%s6 + $0x24] sm:$0xf]
    %v218 = vld [vmem:[%s6 + $0x28] sm:$0xf]
    %v219 = vld [vmem:[%s6 + $0x2c] sm:$0xf]
    %v220 = vld [vmem:[%s6 + $0x30] sm:$0xf]
    %v221 = vld [vmem:[%s6 + $0x34] sm:$0xf]
    %v222 = vld [vmem:[%s6 + $0x38] sm:$0xf]
    %v223 = vld [vmem:[%s6 + $0x3c] sm:$0xf]
    %v240 = vunpack.c.l.b16 %v208
    %v241 = vunpack.c.l.b16 %v209
    %v242 = vunpack.c.l.b16 %v210
    %v243 = vunpack.c.l.b16 %v211
    %v244 = vunpack.c.l.b16 %v212
    %v245 = vunpack.c.l.b16 %v213
    %v246 = vunpack.c.l.b16 %v214
    %v247 = vunpack.c.l.b16 %v215
    %v248 = vunpack.c.l.b16 %v216
    %v249 = vunpack.c.l.b16 %v217
    %v250 = vunpack.c.l.b16 %v218
    %v251 = vunpack.c.l.b16 %v219
    %v252 = vunpack.c.l.b16 %v220
    %v253 = vunpack.c.l.b16 %v221
    %v254 = vunpack.c.l.b16 %v222
    %v255 = vunpack.c.l.b16 %v223
    %v256 = vpack.c.b16 %v241, %v240
    %v257 = vpack.c.b16 %v243, %v242
    %v258 = vpack.c.b16 %v245, %v244
    %v259 = vpack.c.b16 %v247, %v246
    %v260 = vpack.c.b16 %v249, %v248
    %v261 = vpack.c.b16 %v251, %v250
    %v262 = vpack.c.b16 %v253, %v252
    %v263 = vpack.c.b16 %v255, %v254
    %272 = vmatprep.subr.bf16.mxu0 0
    %273 = vmatpush1.bf16.msra.mxu0 %v256
    %274 = vmatprep.subr.bf16.mxu0 0
    %275 = vmatpush1.bf16.msra.mxu0 %v257
    %276 = vmatprep.subr.bf16.mxu0 0
    %277 = vmatpush1.bf16.msra.mxu0 %v258
    %278 = vmatprep.subr.bf16.mxu0 0
    %279 = vmatpush1.bf16.msra.mxu0 %v259
    %280 = vmatprep.subr.bf16.mxu0 0
    %281 = vmatpush1.bf16.msra.mxu0 %v260
    %282 = vmatprep.subr.bf16.mxu0 0
    %283 = vmatpush1.bf16.msra.mxu0 %v261
    %284 = vmatprep.subr.bf16.mxu0 0
    %285 = vmatpush1.bf16.msra.mxu0 %v262
    %286 = vmatprep.subr.bf16.mxu0 0
    %287 = vmatpush1.bf16.msra.mxu0 %v263
    %288 = vmatprep.subr.bf16.mxu0 0
    %289 = vmatpush1.bf16.msra.mxu0 0
    %290 = vmatprep.subr.bf16.mxu0 0
    %291 = vmatpush1.bf16.msra.mxu0 0
    %292 = vmatprep.subr.bf16.mxu0 0
    %293 = vmatpush1.bf16.msra.mxu0 0
    %294 = vmatprep.subr.bf16.mxu0 0
    %295 = vmatpush1.bf16.msra.mxu0 0
    %296 = vmatprep.subr.bf16.mxu0 0
    %297 = vmatpush1.bf16.msra.mxu0 0
    %298 = vmatprep.subr.bf16.mxu0 0
    %299 = vmatpush1.bf16.msra.mxu0 0
    %300 = vmatprep.subr.bf16.mxu0 0
    %301 = vmatpush1.bf16.msra.mxu0 0
    %302 = vmatprep.subr.bf16.mxu0 0
    %303 = vmatpush1.bf16.msra.mxu0 0
    %304 = vmatprep.mubr.bf16.mxu0 0
    %305 = vmatmul.mubr.bf16.gmra.mrb[0].mxu0 %v207
    %v306 = vpop.f32.mrb[0].mxu0
    %v307 = vadd.f32 0.0, %v306
    %v308 = vpop.f32.mrb[0].mxu0
    %v309 = vpop.f32.mrb[0].mxu0
    %v310 = vadd.f32 0.0, %v309
    %v311 = vpop.f32.mrb[0].mxu0
    %312 = vdwg.mxu0
    %vm313 = vcmask 130048
    %v314 = vsel %vm313, %v307, -inf
    %315 = vmax.xlane.f32.xlu0 %v314
    %v316 = vpop.xlane.xlu0 %315
    %v317 = vsel %vm313, %v310, -inf
    %318 = vmax.xlane.f32.xlu0 %v317
    %v319 = vpop.xlane.xlu0 %318
    %v320 = vsub.f32 %v307, %v316
    %v321 = vsub.f32 %v310, %v319
    %v322 = vmul.f32 %v320, 1.442695
    %v323 = vpow.pop %v322
    %v324 = vmul.f32 %v321, 1.442695
    %v325 = vpow.pop %v324
    %v326 = vsel %vm313, %v323, 0.0
    %327 = vadd.xlane.f32.xlu0 %v326
    %v328 = vpop.xlane.xlu0 %327
    %v329 = vsel %vm313, %v325, 0.0
    %330 = vadd.xlane.f32.xlu0 %v329
    %v331 = vpop.xlane.xlu0 %330
    %v332 = vrcp.pop %v328
    %v333 = vrcp.pop %v331
    %v334 = vmul.f32 %v323, %v332
    %v335 = vmul.f32 %v325, %v333
    %336 = vst.msk [vmem:[#allocation2] sm:$0xff] %vm313, %v334
    %337 = vst.msk [vmem:[#allocation2 + $0x8] sm:$0xff] %vm313, %v335
    // Predicated region
    $region30: #{tpu_custom_call.1} parent=1 // pred_check
      _
    $region31: #{tpu_custom_call.1} parent=1 // pred_check_branch
      %339 = sbr.rel (0) target = $region33
    $region32: #{tpu_custom_call.1} parent=1 // pred_region
      %s341 = ssub.s32 256, 256
      %342 = vsyncadd [#allocation3], %s341
      %s343 = sshll.u32 [#allocation2], 4
      %s344 = int_to_ptr.vmem [resolvable:$true] %s343
      %349 = dma.vmem_to_hbm [thread:$0]  %s344, 256, %s7, [#allocation3], 128, 128, 8
    $region33: #{tpu_custom_call.1} parent=1 // pred_fallthru
      _
    // Predicated region
    $region34: #{tpu_custom_call.1} parent=1 // pred_check
      _
    $region35: #{tpu_custom_call.1} parent=1 // pred_check_branch
      %351 = sbr.rel (0) target = $region37
    $region36: #{tpu_custom_call.1} parent=1 // pred_region
      %352 = dma.done [#allocation3], 256
    $region37: #{tpu_custom_call.1} parent=1 // pred_fallthru
      _
    %353 = vsyncpa [#allocation3], 1

// kernel: tpu_custom_call.1
$region0: #{tpu_custom_call.1}
  #allocation0 [shape = 'u32[]', space=smem, size = 0x4, offset = 0x4, fixed_abs, tag = 'smem constant byte address 0x4 - core index']
  #allocation1 [shape = 'u32[144,128]{1,0:T(1,128)}', space=vmem, size = 0x12000, scoped, tag = 'internal scratch']
  %s0 = inlined_call_operand.vmem [shape: bf16[16,32], index: 0, kind: input, shape index: {}]
  %s1 = inlined_call_operand.vmem [shape: bf16[16,32], index: 1, kind: input, shape index: {}]
  %s2 = inlined_call_operand.vmem [shape: bf16[32,128], index: 2, kind: input, shape index: {}]
  %s3 = inlined_call_operand.vmem [shape: f32[1,128], index: 3, kind: input, shape index: {}]
  %s4 = inlined_call_operand.vmem [shape: bf16[32,32], index: 4, kind: input, shape index: {}]
  %s5 = inlined_call_operand.vmem [shape: f32[1,32], index: 5, kind: input, shape index: {}]
  %s6 = inlined_call_operand.vmem [shape: bf16[128,16], index: 6, kind: input, shape index: {}]
  %s7 = inlined_call_operand.hbm [shape: f32[16,16], index: 7, kind: output, shape index: {}]
  %s8 = sld [smem:[#allocation0]]
  $region38: #{tpu_custom_call.1} parent=0
    _
  %s10 = ssub.s32 1, %s8
  %s11 = scalar_select 0, %s10, %s8
  $region1: #{tpu_custom_call.1} parent=0
    #allocation2 [shape = 'u8[8192]{0}', space=vmem, size = 0x2000, scoped, tag = 'output window, operand 0, single buffered']
    #allocation3 [shape = 's32[1]{0}', space=sflag, size = 0x4, scoped, tag = 'scoped memory for tpu_custom_call.1']
    %12 = vsyncpa [#allocation3], 0
    // Predicated region
    $region2: #{tpu_custom_call.1} parent=1 // pred_check
      _
    $region3: #{tpu_custom_call.1} parent=1 // pred_check_branch
      %14 = sbr.rel (0) target = $region5
    $region4: #{tpu_custom_call.1} parent=1 // pred_region
      _
    $region5: #{tpu_custom_call.1} parent=1 // pred_fallthru
      _
    // Predicated region
    $region6: #{tpu_custom_call.1} parent=1 // pred_check
      _
    $region7: #{tpu_custom_call.1} parent=1 // pred_check_branch
      %16 = sbr.rel (0) target = $region9
    $region8: #{tpu_custom_call.1} parent=1 // pred_region
      _
    $region9: #{tpu_custom_call.1} parent=1 // pred_fallthru
      _
    // Predicated region
    $region10: #{tpu_custom_call.1} parent=1 // pred_check
      _
    $region11: #{tpu_custom_call.1} parent=1 // pred_check_branch
      %18 = sbr.rel (0) target = $region13
    $region12: #{tpu_custom_call.1} parent=1 // pred_region
      _
    $region13: #{tpu_custom_call.1} parent=1 // pred_fallthru
      _
    // Predicated region
    $region14: #{tpu_custom_call.1} parent=1 // pred_check
      _
    $region15: #{tpu_custom_call.1} parent=1 // pred_check_branch
      %20 = sbr.rel (0) target = $region17
    $region16: #{tpu_custom_call.1} parent=1 // pred_region
      _
    $region17: #{tpu_custom_call.1} parent=1 // pred_fallthru
      _
    // Predicated region
    $region18: #{tpu_custom_call.1} parent=1 // pred_check
      _
    $region19: #{tpu_custom_call.1} parent=1 // pred_check_branch
      %22 = sbr.rel (0) target = $region21
    $region20: #{tpu_custom_call.1} parent=1 // pred_region
      _
    $region21: #{tpu_custom_call.1} parent=1 // pred_fallthru
      _
    // Predicated region
    $region22: #{tpu_custom_call.1} parent=1 // pred_check
      _
    $region23: #{tpu_custom_call.1} parent=1 // pred_check_branch
      %24 = sbr.rel (0) target = $region25
    $region24: #{tpu_custom_call.1} parent=1 // pred_region
      _
    $region25: #{tpu_custom_call.1} parent=1 // pred_fallthru
      _
    // Predicated region
    $region26: #{tpu_custom_call.1} parent=1 // pred_check
      _
    $region27: #{tpu_custom_call.1} parent=1 // pred_check_branch
      %26 = sbr.rel (0) target = $region29
    $region28: #{tpu_custom_call.1} parent=1 // pred_region
      _
    $region29: #{tpu_custom_call.1} parent=1 // pred_fallthru
      _
    %v28 = vld [vmem:[%s0] sm:$0xf]
    %v29 = vld [vmem:[%s0 + $0x4] sm:$0xf]
    %v30 = vld [vmem:[%s2] sm:$0xf]
    %v31 = vld [vmem:[%s2 + $0x4] sm:$0xf]
    %v32 = vld [vmem:[%s2 + $0x8] sm:$0xf]
    %v33 = vld [vmem:[%s2 + $0xc] sm:$0xf]
    %v34 = vld [vmem:[%s3] sm:$0x1]
    %v36 = vlaneseq
    %v37 = vshrl.u32 %v36, 7
    %v38 = vsub.s32 0, %v37
    %v39 = vrot.slane %v34, %v38
    %v43 = vunpack.c.l.b16 %v28
    %v44 = vunpack.c.l.b16 %v29
    %v45 = vpack.c.b16 %v44, %v43
    %v50 = vunpack.c.l.b16 %v30
    %v51 = vunpack.c.l.b16 %v31
    %v52 = vunpack.c.l.b16 %v32
    %v53 = vunpack.c.l.b16 %v33
    %v54 = vpack.c.b16 %v51, %v50
    %v55 = vpack.c.b16 %v53, %v52
    %vm58 = vcmask 261120
    %v60 = vsel %vm58, %v45, 0
    %62 = vmatprep.subr.bf16.mxu0 0
    %63 = vmatpush1.bf16.msra.mxu0 %v54
    %64 = vmatprep.subr.bf16.mxu0 0
    %65 = vmatpush1.bf16.msra.mxu0 %v55
    %66 = vmatprep.subr.bf16.mxu0 0
    %67 = vmatpush1.bf16.msra.mxu0 0
    %68 = vmatprep.subr.bf16.mxu0 0
    %69 = vmatpush1.bf16.msra.mxu0 0
    %70 = vmatprep.subr.bf16.mxu0 0
    %71 = vmatpush1.bf16.msra.mxu0 0
    %72 = vmatprep.subr.bf16.mxu0 0
    %73 = vmatpush1.bf16.msra.mxu0 0
    %74 = vmatprep.subr.bf16.mxu0 0
    %75 = vmatpush1.bf16.msra.mxu0 0
    %76 = vmatprep.subr.bf16.mxu0 0
    %77 = vmatpush1.bf16.msra.mxu0 0
    %78 = vmatprep.subr.bf16.mxu0 0
    %79 = vmatpush1.bf16.msra.mxu0 0
    %80 = vmatprep.subr.bf16.mxu0 0
    %81 = vmatpush1.bf16.msra.mxu0 0
    %82 = vmatprep.subr.bf16.mxu0 0
    %83 = vmatpush1.bf16.msra.mxu0 0
    %84 = vmatprep.subr.bf16.mxu0 0
    %85 = vmatpush1.bf16.msra.mxu0 0
    %86 = vmatprep.subr.bf16.mxu0 0
    %87 = vmatpush1.bf16.msra.mxu0 0
    %88 = vmatprep.subr.bf16.mxu0 0
    %89 = vmatpush1.bf16.msra.mxu0 0
    %90 = vmatprep.subr.bf16.mxu0 0
    %91 = vmatpush1.bf16.msra.mxu0 0
    %92 = vmatprep.subr.bf16.mxu0 0
    %93 = vmatpush1.bf16.msra.mxu0 0
    %94 = vmatprep.mubr.bf16.mxu0 0
    %95 = vmatmul.mubr.bf16.gmra.mrb[0].mxu0 %v60
    %v96 = vpop.f32.mrb[0].mxu0
    %v97 = vadd.f32 %v39, %v96
    %v98 = vpop.f32.mrb[0].mxu0
    %v99 = vpop.f32.mrb[0].mxu0
    %v100 = vadd.f32 %v39, %v99
    %v101 = vpop.f32.mrb[0].mxu0
    %102 = vdwg.mxu0
    %v103 = vld [vmem:[%s1] sm:$0xf]
    %v104 = vld [vmem:[%s1 + $0x4] sm:$0xf]
    %v105 = vld [vmem:[%s4] sm:$0xf]
    %v106 = vld [vmem:[%s4 + $0x4] sm:$0xf]
    %v107 = vld [vmem:[%s4 + $0x8] sm:$0xf]
    %v108 = vld [vmem:[%s4 + $0xc] sm:$0xf]
    %v109 = vld [vmem:[%s5] sm:$0x1]
    %v111 = vlaneseq
    %v112 = vshrl.u32 %v111, 7
    %v113 = vsub.s32 0, %v112
    %v114 = vrot.slane %v109, %v113
    %v118 = vunpack.c.l.b16 %v103
    %v119 = vunpack.c.l.b16 %v104
    %v120 = vpack.c.b16 %v119, %v118
    %v125 = vunpack.c.l.b16 %v105
    %v126 = vunpack.c.l.b16 %v106
    %v127 = vunpack.c.l.b16 %v107
    %v128 = vunpack.c.l.b16 %v108
    %v129 = vpack.c.b16 %v126, %v125
    %v130 = vpack.c.b16 %v128, %v127
    %v134 = vsel %vm58, %v120, 0
    %136 = vmatprep.subr.bf16.mxu0 0
    %137 = vmatpush1.bf16.msra.mxu0 %v129
    %138 = vmatprep.subr.bf16.mxu0 0
    %139 = vmatpush1.bf16.msra.mxu0 %v130
    %140 = vmatprep.subr.bf16.mxu0 0
    %141 = vmatpush1.bf16.msra.mxu0 0
    %142 = vmatprep.subr.bf16.mxu0 0
    %143 = vmatpush1.bf16.msra.mxu0 0
    %144 = vmatprep.subr.bf16.mxu0 0
    %145 = vmatpush1.bf16.msra.mxu0 0
    %146 = vmatprep.subr.bf16.mxu0 0
    %147 = vmatpush1.bf16.msra.mxu0 0
    %148 = vmatprep.subr.bf16.mxu0 0
    %149 = vmatpush1.bf16.msra.mxu0 0
    %150 = vmatprep.subr.bf16.mxu0 0
    %151 = vmatpush1.bf16.msra.mxu0 0
    %152 = vmatprep.subr.bf16.mxu0 0
    %153 = vmatpush1.bf16.msra.mxu0 0
    %154 = vmatprep.subr.bf16.mxu0 0
    %155 = vmatpush1.bf16.msra.mxu0 0
    %156 = vmatprep.subr.bf16.mxu0 0
    %157 = vmatpush1.bf16.msra.mxu0 0
    %158 = vmatprep.subr.bf16.mxu0 0
    %159 = vmatpush1.bf16.msra.mxu0 0
    %160 = vmatprep.subr.bf16.mxu0 0
    %161 = vmatpush1.bf16.msra.mxu0 0
    %162 = vmatprep.subr.bf16.mxu0 0
    %163 = vmatpush1.bf16.msra.mxu0 0
    %164 = vmatprep.subr.bf16.mxu0 0
    %165 = vmatpush1.bf16.msra.mxu0 0
    %166 = vmatprep.subr.bf16.mxu0 0
    %167 = vmatpush1.bf16.msra.mxu0 0
    %168 = vmatprep.mubr.bf16.mxu0 0
    %169 = vmatmul.mubr.bf16.gmra.mrb[0].mxu0 %v134
    %v170 = vpop.f32.mrb[0].mxu0
    %v171 = vadd.f32 %v114, %v170
    %v172 = vpop.f32.mrb[0].mxu0
    %v173 = vpop.f32.mrb[0].mxu0
    %v174 = vadd.f32 %v114, %v173
    %v175 = vpop.f32.mrb[0].mxu0
    %176 = vdwg.mxu0
    %179 = vrot.lane.b32.xlu0 %v171, 32
    %v180 = vpop.permute.xlu0 %179
    %181 = vrot.lane.b32.xlu0 %v174, 32
    %v182 = vpop.permute.xlu0 %181
    %185 = vrot.lane.b32.xlu0 %v171, 64
    %v186 = vpop.permute.xlu0 %185
    %187 = vrot.lane.b32.xlu0 %v174, 64
    %v188 = vpop.permute.xlu0 %187
    %191 = vrot.lane.b32.xlu0 %v171, 96
    %v192 = vpop.permute.xlu0 %191
    %193 = vrot.lane.b32.xlu0 %v174, 96
    %v194 = vpop.permute.xlu0 %193
    %v197 = vsel %vm58, %v171, %v180
    %v198 = vsel %vm58, %v174, %v182
    %vm199 = vcmask 523264
    %v200 = vsel %vm199, %v197, %v186
    %v201 = vsel %vm199, %v198, %v188
    %vm202 = vcmask 785408
    %v203 = vsel %vm202, %v200, %v192
    %v204 = vsel %vm202, %v201, %v194
    %v205 = vmul.f32 %v97, %v203
    %v206 = vmul.f32 %v100, %v204
    %v207 = vpack.c.bf16 %v206, %v205
    %v208 = vld [vmem:[%s6] sm:$0xf]
    %v209 = vld [vmem:[%s6 + $0x4] sm:$0xf]
    %v210 = vld [vmem:[%s6 + $0x8] sm:$0xf]
    %v211 = vld [vmem:[%s6 + $0xc] sm:$0xf]
    %v212 = vld [vmem:[%s6 + $0x10] sm:$0xf]
    %v213 = vld [vmem:[%s6 + $0x14] sm:$0xf]
    %v214 = vld [vmem:[%s6 + $0x18] sm:$0xf]
    %v215 = vld [vmem:[%s6 + $0x1c] sm:$0xf]
    %v216 = vld [vmem:[%s6 + $0x20] sm:$0xf]
    %v217 = vld [vmem:[%s6 + $0x24] sm:$0xf]
    %v218 = vld [vmem:[%s6 + $0x28] sm:$0xf]
    %v219 = vld [vmem:[%s6 + $0x2c] sm:$0xf]
    %v220 = vld [vmem:[%s6 + $0x30] sm:$0xf]
    %v221 = vld [vmem:[%s6 + $0x34] sm:$0xf]
    %v222 = vld [vmem:[%s6 + $0x38] sm:$0xf]
    %v223 = vld [vmem:[%s6 + $0x3c] sm:$0xf]
    %v240 = vunpack.c.l.b16 %v208
    %v241 = vunpack.c.l.b16 %v209
    %v242 = vunpack.c.l.b16 %v210
    %v243 = vunpack.c.l.b16 %v211
    %v244 = vunpack.c.l.b16 %v212
    %v245 = vunpack.c.l.b16 %v213
    %v246 = vunpack.c.l.b16 %v214
    %v247 = vunpack.c.l.b16 %v215
    %v248 = vunpack.c.l.b16 %v216
    %v249 = vunpack.c.l.b16 %v217
    %v250 = vunpack.c.l.b16 %v218
    %v251 = vunpack.c.l.b16 %v219
    %v252 = vunpack.c.l.b16 %v220
    %v253 = vunpack.c.l.b16 %v221
    %v254 = vunpack.c.l.b16 %v222
    %v255 = vunpack.c.l.b16 %v223
    %v256 = vpack.c.b16 %v241, %v240
    %v257 = vpack.c.b16 %v243, %v242
    %v258 = vpack.c.b16 %v245, %v244
    %v259 = vpack.c.b16 %v247, %v246
    %v260 = vpack.c.b16 %v249, %v248
    %v261 = vpack.c.b16 %v251, %v250
    %v262 = vpack.c.b16 %v253, %v252
    %v263 = vpack.c.b16 %v255, %v254
    %272 = vmatprep.subr.bf16.mxu0 0
    %273 = vmatpush1.bf16.msra.mxu0 %v256
    %274 = vmatprep.subr.bf16.mxu0 0
    %275 = vmatpush1.bf16.msra.mxu0 %v257
    %276 = vmatprep.subr.bf16.mxu0 0
    %277 = vmatpush1.bf16.msra.mxu0 %v258
    %278 = vmatprep.subr.bf16.mxu0 0
    %279 = vmatpush1.bf16.msra.mxu0 %v259
    %280 = vmatprep.subr.bf16.mxu0 0
    %281 = vmatpush1.bf16.msra.mxu0 %v260
    %282 = vmatprep.subr.bf16.mxu0 0
    %283 = vmatpush1.bf16.msra.mxu0 %v261
    %284 = vmatprep.subr.bf16.mxu0 0
    %285 = vmatpush1.bf16.msra.mxu0 %v262
    %286 = vmatprep.subr.bf16.mxu0 0
    %287 = vmatpush1.bf16.msra.mxu0 %v263
    %288 = vmatprep.subr.bf16.mxu0 0
    %289 = vmatpush1.bf16.msra.mxu0 0
    %290 = vmatprep.subr.bf16.mxu0 0
    %291 = vmatpush1.bf16.msra.mxu0 0
    %292 = vmatprep.subr.bf16.mxu0 0
    %293 = vmatpush1.bf16.msra.mxu0 0
    %294 = vmatprep.subr.bf16.mxu0 0
    %295 = vmatpush1.bf16.msra.mxu0 0
    %296 = vmatprep.subr.bf16.mxu0 0
    %297 = vmatpush1.bf16.msra.mxu0 0
    %298 = vmatprep.subr.bf16.mxu0 0
    %299 = vmatpush1.bf16.msra.mxu0 0
    %300 = vmatprep.subr.bf16.mxu0 0
    %301 = vmatpush1.bf16.msra.mxu0 0
    %302 = vmatprep.subr.bf16.mxu0 0
    %303 = vmatpush1.bf16.msra.mxu0 0
    %304 = vmatprep.mubr.bf16.mxu0 0
    %305 = vmatmul.mubr.bf16.gmra.mrb[0].mxu0 %v207
    %v306 = vpop.f32.mrb[0].mxu0
    %v307 = vadd.f32 0.0, %v306
    %v308 = vpop.f32.mrb[0].mxu0
    %v309 = vpop.f32.mrb[0].mxu0
    %v310 = vadd.f32 0.0, %v309
    %v311 = vpop.f32.mrb[0].mxu0
    %312 = vdwg.mxu0
    %vm313 = vcmask 130048
    %v314 = vsel %vm313, %v307, -inf
    %315 = vmax.xlane.f32.xlu0 %v314
    %v316 = vpop.xlane.xlu0 %315
    %v317 = vsel %vm313, %v310, -inf
    %318 = vmax.xlane.f32.xlu0 %v317
    %v319 = vpop.xlane.xlu0 %318
    %v320 = vsub.f32 %v307, %v316
    %v321 = vsub.f32 %v310, %v319
    %v322 = vmul.f32 %v320, 1.442695
    %v323 = vpow.pop %v322
    %v324 = vmul.f32 %v321, 1.442695
    %v325 = vpow.pop %v324
    %v326 = vsel %vm313, %v323, 0.0
    %327 = vadd.xlane.f32.xlu0 %v326
    %v328 = vpop.xlane.xlu0 %327
    %v329 = vsel %vm313, %v325, 0.0
    %330 = vadd.xlane.f32.xlu0 %v329
    %v331 = vpop.xlane.xlu0 %330
    %v332 = vrcp.pop %v328
    %v333 = vrcp.pop %v331
    %v334 = vmul.f32 %v323, %v332
    %v335 = vmul.f32 %v325, %v333
    %336 = vst.msk [vmem:[#allocation2] sm:$0xff] %vm313, %v334
    %337 = vst.msk [vmem:[#allocation2 + $0x8] sm:$0xff] %vm313, %v335
    // Predicated region
    $region30: #{tpu_custom_call.1} parent=1 // pred_check
      _
    $region31: #{tpu_custom_call.1} parent=1 // pred_check_branch
      %339 = sbr.rel (0) target = $region33
    $region32: #{tpu_custom_call.1} parent=1 // pred_region
      %s341 = ssub.s32 256, 256
      %342 = vsyncadd [#allocation3], %s341
      %s343 = sshll.u32 [#allocation2], 4
      %s344 = int_to_ptr.vmem [resolvable:$true] %s343
      %349 = dma.vmem_to_hbm [thread:$0]  %s344, 256, %s7, [#allocation3], 128, 128, 8
    $region33: #{tpu_custom_call.1} parent=1 // pred_fallthru
      _
    // Predicated region
    $region34: #{tpu_custom_call.1} parent=1 // pred_check
      _
    $region35: #{tpu_custom_call.1} parent=1 // pred_check_branch
      %351 = sbr.rel (0) target = $region37
    $region36: #{tpu_custom_call.1} parent=1 // pred_region
      %352 = dma.done [#allocation3], 256
    $region37: #{tpu_custom_call.1} parent=1 // pred_fallthru
      _
    %353 = vsyncpa [#allocation3], 1

</llo_original>
